<compile_context>
chip_gen: v6e
topology: v6e:2x2x1
jax: 0.10.0
libtpu: 0.0.40
codegen_flags: <defaults>
</compile_context>

<pallas_src>
import functools

import jax
import jax.numpy as jnp
from jax.experimental import pallas as pl
from jax.experimental.pallas import tpu as pltpu

_EPS = 2.3e-08


def _adain_kernel(x_ref, mu_d_ref, sig_d_ref, o_ref, *, hw):
    # x_ref / o_ref: (rb, HW) in the input dtype; mu_d_ref / sig_d_ref: (rb, 1) f32.
    x = x_ref[...].astype(jnp.float32)            # identity (no copy) for f32 inputs

    # Instance stats of x over the flattened spatial axis (row-local).
    mu_x = jnp.sum(x, axis=1, keepdims=True) / hw            # (rb, 1)
    xc = x - mu_x
    ss_x = jnp.sum(xc * xc, axis=1, keepdims=True)           # (rb, 1)
    inv_sigma_x = jax.lax.rsqrt((ss_x + _EPS) / hw)          # (rb, 1), EUP per row

    # One per-row scale/shift; the big tensor only sees a fused multiply-add.
    scale = sig_d_ref[...] * inv_sigma_x                      # (rb, 1)
    o_ref[...] = (xc * scale + mu_d_ref[...]).astype(o_ref.dtype)


def _round_up(a, b):
    return (a + b - 1) // b * b


@functools.lru_cache(maxsize=1)
def _vmem_capacity_bytes():
    """Physical VMEM per TensorCore (128 MiB v5e/v6e, 64 MiB v7x); safe fallback."""
    cap = None
    try:
        cap = getattr(pltpu.get_tpu_info(), "vmem_capacity_bytes", None)
    except Exception:
        cap = None
    if not cap or cap <= 0:
        cap = 64 * 1024 * 1024            # conservative: v7x per-TC VMEM
    return int(cap)


def _choose_row_block(R, HW, itemsize):
    """Pick rows-per-grid-step from the full VMEM working-set budget."""
    sub = max(8, 32 // itemsize)          # sublane packing: 8 f32, 16 bf16, 32 int8

    vmem_cap = _vmem_capacity_bytes()
    vmem_limit = (vmem_cap * 3) // 4      # 96 MiB on v5e/v6e, 48 MiB on v7x
    # Full working set per grid step: double-buffered input + output tiles in
    # the native dtype plus ~3 f32-sized temporaries (upcast / centered / result).
    per_row_bytes = HW * (4 * itemsize + 12) + 512
    usable = int(vmem_limit * 0.85)       # headroom for compiler scratch + stat columns
    rb_cap = max(sub, (usable // per_row_bytes) // sub * sub)

    if R <= sub:
        # Single block equal to the full row extent (full-dim exception).
        return R, 1, vmem_limit

    max_steps = pl.cdiv(R, sub)
    min_steps = pl.cdiv(R, rb_cap)
    # Prefer >= 4 grid steps when rows permit: pipeline ramp + even work for
    # v7x's two TensorCores sharing the "parallel" axis.
    steps = max(min_steps, min(4, max_steps))
    rb = min(_round_up(pl.cdiv(R, steps), sub), rb_cap)
    rb = min(rb, _round_up(R, sub))

    num_blocks = pl.cdiv(R, rb)
    if num_blocks > 1 and num_blocks % 2 == 1:
        # Nudge to an even block count so neither v7x TensorCore sits idle.
        for rb_c in (rb + sub, rb - sub, rb + 2 * sub, rb - 2 * sub):
            if sub <= rb_c <= rb_cap and pl.cdiv(R, rb_c) % 2 == 0:
                rb = rb_c
                break
    num_blocks = pl.cdiv(R, rb)
    return rb, num_blocks, vmem_limit


@jax.jit
def adain(x, d):
    """x: (N, C, H, W), d: (N, C, L) -> (N, C, H, W)."""
    N, C, H, W = x.shape
    Nd, Cd, L = d.shape
    assert (N, C) == (Nd, Cd)

    R = N * C
    HW = H * W
    itemsize = jnp.dtype(x.dtype).itemsize

    rb, num_blocks, vmem_limit = _choose_row_block(R, HW, itemsize)

    # Row-major 2D view of the big tensor; no padding, no extra HBM passes.
    x2 = x.reshape(R, HW)

    # Style-code stats on the tiny tensor, hoisted out of the kernel.
    d2 = d.reshape(R, L).astype(jnp.float32)
    mu_d = jnp.sum(d2, axis=1, keepdims=True) / L                          # (R, 1)
    sig_d = jnp.sqrt(
        (jnp.sum((d2 - mu_d) ** 2, axis=1, keepdims=True) + _EPS) / L)     # (R, 1)

    kernel = functools.partial(_adain_kernel, hw=HW)

    out2 = pl.pallas_call(
        kernel,
        out_shape=jax.ShapeDtypeStruct((R, HW), x.dtype),
        grid_spec=pltpu.PrefetchScalarGridSpec(
            num_scalar_prefetch=0,
            grid=(num_blocks,),
            in_specs=[
                pl.BlockSpec((rb, HW), lambda i: (i, 0)),   # full-HW contiguous slab
                pl.BlockSpec((rb, 1), lambda i: (i, 0)),    # mu_d column
                pl.BlockSpec((rb, 1), lambda i: (i, 0)),    # sigma_d column
            ],
            out_specs=pl.BlockSpec((rb, HW), lambda i: (i, 0)),
        ),
        compiler_params=pltpu.CompilerParams(
            dimension_semantics=("parallel",),
            vmem_limit_bytes=int(vmem_limit),
        ),
    )(x2, mu_d, sig_d)

    return out2.reshape(N, C, H, W)


def _adain_ref(x, d):
    """Pure-JAX reference matching the PyTorch module exactly."""
    N, C, H, W = x.shape
    L = d.shape[2]
    mu_x = jnp.sum(x, axis=(2, 3)) / (H * W)                             # (N, C)
    sig_x = jnp.sqrt(
        (jnp.sum((x - mu_x[:, :, None, None]) ** 2, axis=(2, 3)) + _EPS)
        / (H * W))                                                       # (N, C)
    mu_d = jnp.sum(d, axis=2) / L                                        # (N, C)
    sig_d = jnp.sqrt(
        (jnp.sum((d - mu_d[:, :, None]) ** 2, axis=2) + _EPS) / L)       # (N, C)
    return (sig_d[:, :, None, None]
            * ((x - mu_x[:, :, None, None]) / sig_x[:, :, None, None])
            + mu_d[:, :, None, None])


if __name__ == "__main__":
    key = jax.random.PRNGKey(0)
    kx, kd = jax.random.split(key)

    # Main case: aligned shapes.
    N, C, H, W = 2, 4, 16, 16
    L = 8
    x = jax.random.normal(kx, (N, C, H, W), dtype=jnp.float32) * 2.0 + 0.5
    d = jax.random.normal(kd, (N, C, L), dtype=jnp.float32) * 1.5 - 0.3

    out = adain(x, d)
    jax.block_until_ready(out)
    ref = _adain_ref(x, d)
    assert out.shape == (N, C, H, W)
    assert jnp.allclose(out, ref, atol=1e-5, rtol=1e-5), (
        float(jnp.max(jnp.abs(out - ref))))

    # Small, fully "full-dim block" case (R < 8, HW % 128 != 0).
    k2x, k2d = jax.random.split(jax.random.PRNGKey(1))
    xs = jax.random.normal(k2x, (1, 3, 7, 7), dtype=jnp.float32) + 0.2
    ds = jax.random.normal(k2d, (1, 3, 5), dtype=jnp.float32) * 0.7
    outs = adain(xs, ds)
    jax.block_until_ready(outs)
    refs = _adain_ref(xs, ds)
    assert outs.shape == xs.shape
    assert jnp.allclose(outs, refs, atol=1e-5, rtol=1e-5), (
        float(jnp.max(jnp.abs(outs - refs))))

    # Ragged row-block case (R % rb != 0, multiple grid steps, HW % 128 != 0).
    k3x, k3d = jax.random.split(jax.random.PRNGKey(2))
    xr = jax.random.normal(k3x, (2, 9, 5, 5), dtype=jnp.float32) * 1.3 - 0.1
    dr = jax.random.normal(k3d, (2, 9, 6), dtype=jnp.float32) * 0.9 + 0.4
    outr = adain(xr, dr)
    jax.block_until_ready(outr)
    refr = _adain_ref(xr, dr)
    assert outr.shape == xr.shape
    assert jnp.allclose(outr, refr, atol=1e-5, rtol=1e-5), (
        float(jnp.max(jnp.abs(outr - refr))))

    print("KERNEL_OK")
</pallas_src>

<mosaic_0001>
module attributes {stable_mosaic.version = 11 : i64} {
  func.func @_adain_kernel(%arg0: i32, %arg1: memref<8x256xf32, #tpu.memory_space<vmem>>, %arg2: memref<8x1xf32, #tpu.memory_space<vmem>>, %arg3: memref<8x1xf32, #tpu.memory_space<vmem>>, %arg4: memref<8x256xf32, #tpu.memory_space<vmem>>) attributes {dimension_semantics = [#tpu.dimension_semantics<parallel>], iteration_bounds = array<i64: 1>, scalar_prefetch = 0 : i64, scratch_operands = 0 : i64, tpu.core_type = #tpu.core_type<tc>, window_params = [{transform_indices = @transform_0, window_bounds = array<i64: 8, 256>}, {transform_indices = @transform_1, window_bounds = array<i64: 8, 1>}, {transform_indices = @transform_2, window_bounds = array<i64: 8, 1>}, {transform_indices = @transform_3, window_bounds = array<i64: 8, 256>}]} {
    %c0 = arith.constant 0 : index
    %c0_0 = arith.constant 0 : index
    %0 = vector.load %arg1[%c0, %c0_0] : memref<8x256xf32, #tpu.memory_space<vmem>>, vector<8x256xf32>
    %cst = arith.constant dense<0.000000e+00> : vector<8xf32>
    %1 = vector.multi_reduction <add>, %0, %cst [1] : vector<8x256xf32> to vector<8xf32>
    %2 = vector.shape_cast %1 : vector<8xf32> to vector<8x1xf32>
    %cst_1 = arith.constant 2.560000e+02 : f32
    %3 = vector.broadcast %cst_1 : f32 to vector<8x1xf32>
    %4 = arith.divf %2, %3 : vector<8x1xf32>
    %5 = vector.broadcast %4 : vector<8x1xf32> to vector<8x256xf32>
    %6 = arith.subf %0, %5 : vector<8x256xf32>
    %7 = arith.mulf %6, %6 : vector<8x256xf32>
    %cst_2 = arith.constant dense<0.000000e+00> : vector<8xf32>
    %8 = vector.multi_reduction <add>, %7, %cst_2 [1] : vector<8x256xf32> to vector<8xf32>
    %9 = vector.shape_cast %8 : vector<8xf32> to vector<8x1xf32>
    %cst_3 = arith.constant 2.300000e-08 : f32
    %10 = vector.broadcast %cst_3 : f32 to vector<8x1xf32>
    %11 = arith.addf %9, %10 : vector<8x1xf32>
    %cst_4 = arith.constant 2.560000e+02 : f32
    %12 = vector.broadcast %cst_4 : f32 to vector<8x1xf32>
    %13 = arith.divf %11, %12 : vector<8x1xf32>
    %14 = math.rsqrt %13 : vector<8x1xf32>
    %c0_5 = arith.constant 0 : index
    %c0_6 = arith.constant 0 : index
    %15 = vector.load %arg3[%c0_5, %c0_6] : memref<8x1xf32, #tpu.memory_space<vmem>>, vector<8x1xf32>
    %16 = arith.mulf %15, %14 : vector<8x1xf32>
    %17 = vector.broadcast %16 : vector<8x1xf32> to vector<8x256xf32>
    %18 = arith.mulf %6, %17 : vector<8x256xf32>
    %c0_7 = arith.constant 0 : index
    %c0_8 = arith.constant 0 : index
    %19 = vector.load %arg2[%c0_7, %c0_8] : memref<8x1xf32, #tpu.memory_space<vmem>>, vector<8x1xf32>
    %20 = vector.broadcast %19 : vector<8x1xf32> to vector<8x256xf32>
    %21 = arith.addf %18, %20 : vector<8x256xf32>
    %c0_9 = arith.constant 0 : index
    %c0_10 = arith.constant 0 : index
    %22 = vector.load %arg4[%c0_9, %c0_10] : memref<8x256xf32, #tpu.memory_space<vmem>>, vector<8x256xf32>
    tpu.vector_store %arg4[%c0_9, %c0_10], %21 {strides = array<i32>} : memref<8x256xf32, #tpu.memory_space<vmem>>, vector<8x256xf32>,
    return
  }
  func.func @transform_0(%arg0: i32) -> (i32, i32) {
    %c0_i32 = arith.constant 0 : i32
    %c0_i32_0 = arith.constant 0 : i32
    return %arg0, %c0_i32 : i32, i32
  }
  func.func @transform_1(%arg0: i32) -> (i32, i32) {
    %c0_i32 = arith.constant 0 : i32
    %c0_i32_0 = arith.constant 0 : i32
    return %arg0, %c0_i32 : i32, i32
  }
  func.func @transform_2(%arg0: i32) -> (i32, i32) {
    %c0_i32 = arith.constant 0 : i32
    %c0_i32_0 = arith.constant 0 : i32
    return %arg0, %c0_i32 : i32, i32
  }
  func.func @transform_3(%arg0: i32) -> (i32, i32) {
    %c0_i32 = arith.constant 0 : i32
    %c0_i32_0 = arith.constant 0 : i32
    return %arg0, %c0_i32 : i32, i32
  }
}

</mosaic_0001>

<llo_original>
// kernel: adain.1
$region0: #{adain.1}
  #allocation0 [shape = 'u32[]', space=smem, size = 0x4, offset = 0x4, fixed_abs, tag = 'smem constant byte address 0x4 - core index']
  #allocation1 [shape = 'u32[144,128]{1,0:T(1,128)}', space=vmem, size = 0x12000, scoped, tag = 'internal scratch']
  %s0 = inlined_call_operand.vmem [shape: f32[8,256], index: 0, kind: input, shape index: {}]
  %s1 = inlined_call_operand.vmem [shape: f32[8,1], index: 1, kind: input, shape index: {}]
  %s2 = inlined_call_operand.vmem [shape: f32[8,1], index: 2, kind: input, shape index: {}]
  %s3 = inlined_call_operand.vmem [shape: f32[8,256], index: 3, kind: output, shape index: {}]
  %s4 = sld [smem:[#allocation0]]
  $region22: #{adain.1} parent=0
    _
  %s6 = ssub.s32 1, %s4
  %s7 = scalar_select 0, %s6, %s4
  // Predicated region
  $region2: #{adain.1} parent=0 // pred_check
    _
  $region3: #{adain.1} parent=0 // pred_check_branch
    %9 = sbr.rel (0) target = $region5
  $region4: #{adain.1} parent=0 // pred_region
    _
  $region5: #{adain.1} parent=0 // pred_fallthru
    _
  // Predicated region
  $region6: #{adain.1} parent=0 // pred_check
    _
  $region7: #{adain.1} parent=0 // pred_check_branch
    %11 = sbr.rel (0) target = $region9
  $region8: #{adain.1} parent=0 // pred_region
    _
  $region9: #{adain.1} parent=0 // pred_fallthru
    _
  // Predicated region
  $region10: #{adain.1} parent=0 // pred_check
    _
  $region11: #{adain.1} parent=0 // pred_check_branch
    %13 = sbr.rel (0) target = $region13
  $region12: #{adain.1} parent=0 // pred_region
    _
  $region13: #{adain.1} parent=0 // pred_fallthru
    _
  %v14 = vld [vmem:[%s0] sm:$0xff]
  %v15 = vld [vmem:[%s0 + $0x8] sm:$0xff]
  %v16 = vadd.f32 %v14, %v15
  %17 = vadd.xlane.f32.xlu0 %v16
  %v18 = vpop.xlane.xlu0 %17
  %v19 = vrcp.pop 256.0
  %v20 = vmul.f32 %v18, %v19
  %v21 = vsub.f32 %v14, %v20
  %v22 = vsub.f32 %v15, %v20
  %v23 = vmul.f32 %v21, %v21
  %v24 = vmul.f32 %v22, %v22
  %v25 = vadd.f32 %v23, %v24
  %26 = vadd.xlane.f32.xlu0 %v25
  %v27 = vpop.xlane.xlu0 %26
  %v28 = vadd.f32 %v27, 2.3e-08
  %v29 = vmul.f32 %v28, %v19
  %v30 = vrsqrt.pop %v29
  %v31 = vld [vmem:[%s2] sm:$0xff]
  %v32 = vmul.f32 %v31, %v30
  %34 = vset.pattern.permute.xlu0 0
  %35 = vperm.xlu0 %34, %v32
  %v36 = vpop.permute.xlu0 %35
  %v38 = vmul.f32 %v21, %v36
  %v39 = vmul.f32 %v22, %v36
  %v40 = vld [vmem:[%s1] sm:$0xff]
  %42 = vset.pattern.permute.xlu0 0
  %43 = vperm.xlu0 %42, %v40
  %v44 = vpop.permute.xlu0 %43
  %v46 = vadd.f32 %v38, %v44
  %v47 = vadd.f32 %v39, %v44
  %48 = vst [vmem:[%s3] sm:$0xff] %v46
  %49 = vst [vmem:[%s3 + $0x8] sm:$0xff] %v47
  // Predicated region
  $region14: #{adain.1} parent=0 // pred_check
    _
  $region15: #{adain.1} parent=0 // pred_check_branch
    %51 = sbr.rel (0) target = $region17
  $region16: #{adain.1} parent=0 // pred_region
    _
  $region17: #{adain.1} parent=0 // pred_fallthru
    _
  // Predicated region
  $region18: #{adain.1} parent=0 // pred_check
    _
  $region19: #{adain.1} parent=0 // pred_check_branch
    %53 = sbr.rel (0) target = $region21
  $region20: #{adain.1} parent=0 // pred_region
    _
  $region21: #{adain.1} parent=0 // pred_fallthru
    _

</llo_original>
